<compile_context>
chip_gen: v5e
topology: v5e:2x2
jax: 0.10.0
libtpu: 0.0.40
codegen_flags: <defaults>
</compile_context>

<pallas_src>
import jax
import jax.numpy as jnp
from jax import lax
from jax.experimental import pallas as pl
from jax.experimental.pallas import tpu as pltpu

EPS = 1e-5


# ----------------------------- helpers --------------------------------------


def _round_up(n, m):
    return -(-n // m) * m


def _pick_row_tile(rows, f32_bytes_per_row, target_block_bytes=2 << 20):
    """Row tile: ~target_block_bytes per grid step, a multiple of 8, and
    (when there is enough work) at least 2 grid steps so
    dimension_semantics=("parallel",) can shard across v7x's two cores."""
    rows_p8 = _round_up(max(rows, 1), 8)
    rt = max(8, (target_block_bytes // max(f32_bytes_per_row, 1)) // 8 * 8)
    if rows_p8 >= 16:
        rt = min(rt, _round_up(-(-rows_p8 // 2), 8))
    return min(rt, rows_p8)


def _pad_rows(x2, rows_padded):
    rows = x2.shape[0]
    if rows_padded == rows:
        return x2
    return jnp.pad(x2, ((0, rows_padded - rows), (0, 0)))


def _ln_rows(x, w, b):
    """Row-wise LayerNorm of an (rows, d) f32 tile; one-pass mean / E[x^2];
    biased variance and eps=1e-5 (matches torch.nn.LayerNorm)."""
    d = x.shape[-1]
    inv_d = 1.0 / d
    s = jnp.sum(x, axis=-1, keepdims=True)
    s2 = jnp.sum(x * x, axis=-1, keepdims=True)
    mean = s * inv_d
    var = s2 * inv_d - mean * mean
    inv = lax.rsqrt(var + EPS)
    return (x - mean) * inv * w + b


# ----------------------------- kernels ---------------------------------------


def _layernorm_kernel(x_ref, w_ref, b_ref, o_ref):
    y = _ln_rows(x_ref[...].astype(jnp.float32), w_ref[...], b_ref[...])
    o_ref[...] = y.astype(o_ref.dtype)


def _fused_prenorm_kernel(x_ref, c_ref, wx_ref, bx_ref, wc_ref, bc_ref,
                          pwx_ref, pwc_ref, pb_ref, o_ref):
    """LN(x) tile, LN(context) tile, then the fused projection on the MXU.
    Two small dot pushes instead of a lane-concat + single dot: same math,
    avoids an in-kernel lane concatenation of narrow (32/16-wide) operands."""
    y = _ln_rows(x_ref[...].astype(jnp.float32), wx_ref[...], bx_ref[...])
    z = _ln_rows(c_ref[...].astype(jnp.float32), wc_ref[...], bc_ref[...])
    o = (jnp.dot(y, pwx_ref[...], preferred_element_type=jnp.float32)
         + jnp.dot(z, pwc_ref[...], preferred_element_type=jnp.float32)
         + pb_ref[...])
    o_ref[...] = o.astype(o_ref.dtype)


# ----------------------------- wrappers --------------------------------------


def layernorm_pallas(x, weight, bias):
    """Standalone LayerNorm over the last axis (generic-fn fallback path)."""
    orig_shape = x.shape
    dim = orig_shape[-1]
    x2 = x.reshape(-1, dim)
    rows = x2.shape[0]

    rt = _pick_row_tile(rows, 2 * dim * 4)          # in + out per row, f32
    rows_p = _round_up(rows, rt)
    x2 = _pad_rows(x2, rows_p)
    grid = (rows_p // rt,)

    out = pl.pallas_call(
        _layernorm_kernel,
        out_shape=jax.ShapeDtypeStruct((rows_p, dim), x.dtype),
        grid_spec=pltpu.PrefetchScalarGridSpec(
            num_scalar_prefetch=0,
            grid=grid,
            in_specs=[
                pl.BlockSpec((rt, dim), lambda i: (i, 0)),
                pl.BlockSpec((1, dim), lambda i: (0, 0)),
                pl.BlockSpec((1, dim), lambda i: (0, 0)),
            ],
            out_specs=pl.BlockSpec((rt, dim), lambda i: (i, 0)),
        ),
        compiler_params=pltpu.CompilerParams(
            dimension_semantics=("parallel",),
            vmem_limit_bytes=32 << 20),
    )(x2,
      weight.reshape(1, dim).astype(jnp.float32),
      bias.reshape(1, dim).astype(jnp.float32))
    return out[:rows].reshape(orig_shape)


def prenorm_linear_cross_pallas(x, context, norm_w, norm_b, ctx_w, ctx_b,
                                Wx, Wc, b_out):
    """Fused PreNorm + linear-cross fn: one pallas_call for LN(x), LN(context)
    and the projection y @ Wx + z @ Wc + b."""
    *lead, dim = x.shape
    cdim = context.shape[-1]
    out_dim = Wx.shape[1]

    x2 = x.reshape(-1, dim)
    c2 = context.reshape(-1, cdim)
    rows = x2.shape[0]

    # f32 footprint per row inside the kernel: x + context + output.
    rt = _pick_row_tile(rows, (dim + cdim + out_dim) * 4)
    rows_p = _round_up(rows, rt)
    x2 = _pad_rows(x2, rows_p)
    c2 = _pad_rows(c2, rows_p)
    grid = (rows_p // rt,)

    out = pl.pallas_call(
        _fused_prenorm_kernel,
        out_shape=jax.ShapeDtypeStruct((rows_p, out_dim), x.dtype),
        grid_spec=pltpu.PrefetchScalarGridSpec(
            num_scalar_prefetch=0,
            grid=grid,
            in_specs=[
                pl.BlockSpec((rt, dim), lambda i: (i, 0)),        # x tile
                pl.BlockSpec((rt, cdim), lambda i: (i, 0)),       # context tile
                pl.BlockSpec((1, dim), lambda i: (0, 0)),         # LN(x) weight
                pl.BlockSpec((1, dim), lambda i: (0, 0)),         # LN(x) bias
                pl.BlockSpec((1, cdim), lambda i: (0, 0)),        # LN(ctx) weight
                pl.BlockSpec((1, cdim), lambda i: (0, 0)),        # LN(ctx) bias
                pl.BlockSpec((dim, out_dim), lambda i: (0, 0)),   # Wx
                pl.BlockSpec((cdim, out_dim), lambda i: (0, 0)),  # Wc
                pl.BlockSpec((1, out_dim), lambda i: (0, 0)),     # fn bias
            ],
            out_specs=pl.BlockSpec((rt, out_dim), lambda i: (i, 0)),
        ),
        compiler_params=pltpu.CompilerParams(
            dimension_semantics=("parallel",),
            vmem_limit_bytes=32 << 20),
    )(x2, c2,
      norm_w.reshape(1, dim).astype(jnp.float32),
      norm_b.reshape(1, dim).astype(jnp.float32),
      ctx_w.reshape(1, cdim).astype(jnp.float32),
      ctx_b.reshape(1, cdim).astype(jnp.float32),
      Wx.astype(jnp.float32),
      Wc.astype(jnp.float32),
      b_out.reshape(1, out_dim).astype(jnp.float32))
    return out[:rows].reshape(*lead, out_dim)


# ----------------------------- modules ---------------------------------------


class LinearCross:
    """Deterministic injected `fn`: fn(y, context=z) = y @ Wx + z @ Wc + b.
    Structured so PreNormPallas can fuse it into the Pallas kernel."""

    def __init__(self, Wx, Wc, b):
        self.Wx, self.Wc, self.b = Wx, Wc, b

    def __call__(self, x, context=None):
        return (jnp.einsum("...d,de->...e", x, self.Wx)
                + jnp.einsum("...c,ce->...e", context, self.Wc) + self.b)


class PreNormPallas:
    """JAX/Pallas equivalent of the PyTorch PreNorm module."""

    def __init__(self, dim, fn, context_dim=None):
        self.fn = fn
        self.context_dim = context_dim
        # nn.LayerNorm(dim) init: weight=ones, bias=zeros
        self.norm_w = jnp.ones((dim,), jnp.float32)
        self.norm_b = jnp.zeros((dim,), jnp.float32)
        if context_dim is not None:
            self.norm_ctx_w = jnp.ones((context_dim,), jnp.float32)
            self.norm_ctx_b = jnp.zeros((context_dim,), jnp.float32)
        else:
            self.norm_ctx_w = None
            self.norm_ctx_b = None

    def __call__(self, x, **kwargs):
        # Fast path: fn is the known linear-cross projection -> fully fused.
        if (self.context_dim is not None and isinstance(self.fn, LinearCross)
                and "context" in kwargs):
            return prenorm_linear_cross_pallas(
                x, kwargs["context"],
                self.norm_w, self.norm_b,
                self.norm_ctx_w, self.norm_ctx_b,
                self.fn.Wx, self.fn.Wc, self.fn.b)

        # Generic path: Pallas LayerNorm(s), then arbitrary user fn (plain JAX).
        # TODO(synk): arbitrary injected sub-modules `fn` cannot be fused into
        # the Pallas kernel in general; only their pre-norms run in Pallas.
        y = layernorm_pallas(x, self.norm_w, self.norm_b)
        if self.norm_ctx_w is not None:
            z = layernorm_pallas(kwargs["context"],
                                 self.norm_ctx_w, self.norm_ctx_b)
            kwargs = dict(kwargs, context=z)
        return self.fn(y, **kwargs)


# ----------------------------- demo / check ----------------------------------

if __name__ == "__main__":
    key = jax.random.PRNGKey(0)
    k1, k2, k3, k4, k5 = jax.random.split(key, 5)

    batch, seq, dim, context_dim = 2, 8, 32, 16

    x = jax.random.normal(k1, (batch, seq, dim), jnp.float32)
    context = jax.random.normal(k2, (batch, seq, context_dim), jnp.float32)

    # Deterministic synthetic parameters for the injected `fn`.
    Wx = jax.random.normal(k3, (dim, dim), jnp.float32) * 0.05
    Wc = jax.random.normal(k4, (context_dim, dim), jnp.float32) * 0.05
    bf = jax.random.normal(k5, (dim,), jnp.float32) * 0.01

    fn = LinearCross(Wx, Wc, bf)
    prenorm = PreNormPallas(dim, fn, context_dim=context_dim)

    out = jax.block_until_ready(prenorm(x, context=context))
    assert out.shape == (batch, seq, dim)

    # Reference (pure JAX LayerNorm, same semantics as torch.nn.LayerNorm).
    def ln_ref(v, w, b):
        m = jnp.mean(v, axis=-1, keepdims=True)
        var = jnp.mean((v - m) ** 2, axis=-1, keepdims=True)
        return (v - m) * lax.rsqrt(var + EPS) * w + b

    ref = fn(ln_ref(x, prenorm.norm_w, prenorm.norm_b),
             context=ln_ref(context, prenorm.norm_ctx_w, prenorm.norm_ctx_b))
    # The in-kernel MXU dot and XLA's default-precision f32 einsum may use
    # different matmul precisions; that shows up at the ~1e-3 level, while
    # real wiring/LN bugs would be O(0.1+).
    assert jnp.allclose(out, ref, atol=5e-3, rtol=5e-3), "fused path mismatch"

    # Generic (non-fused) path: PreNorm without context, arbitrary fn.
    prenorm_plain = PreNormPallas(dim, lambda v: v * 2.0 + 1.0)
    out_plain = jax.block_until_ready(prenorm_plain(x))
    ref_plain = ln_ref(x, prenorm_plain.norm_w, prenorm_plain.norm_b) * 2.0 + 1.0
    assert jnp.allclose(out_plain, ref_plain, atol=1e-5, rtol=1e-5), \
        "LayerNorm-only path mismatch"

    print("KERNEL_OK")
</pallas_src>

<mosaic_0001>
module attributes {stable_mosaic.version = 11 : i64} {
  func.func @_fused_prenorm_kernel(%arg0: i32, %arg1: memref<8x32xf32, #tpu.memory_space<vmem>>, %arg2: memref<8x16xf32, #tpu.memory_space<vmem>>, %arg3: memref<1x32xf32, #tpu.memory_space<vmem>>, %arg4: memref<1x32xf32, #tpu.memory_space<vmem>>, %arg5: memref<1x16xf32, #tpu.memory_space<vmem>>, %arg6: memref<1x16xf32, #tpu.memory_space<vmem>>, %arg7: memref<32x32xf32, #tpu.memory_space<vmem>>, %arg8: memref<16x32xf32, #tpu.memory_space<vmem>>, %arg9: memref<1x32xf32, #tpu.memory_space<vmem>>, %arg10: memref<8x32xf32, #tpu.memory_space<vmem>>) attributes {dimension_semantics = [#tpu.dimension_semantics<parallel>], iteration_bounds = array<i64: 2>, scalar_prefetch = 0 : i64, scratch_operands = 0 : i64, tpu.core_type = #tpu.core_type<tc>, window_params = [{transform_indices = @transform_0, window_bounds = array<i64: 8, 32>}, {transform_indices = @transform_1, window_bounds = array<i64: 8, 16>}, {pipeline_mode = #tpu.pipeline_mode<synchronous>, transform_indices = @transform_2, window_bounds = array<i64: 1, 32>}, {pipeline_mode = #tpu.pipeline_mode<synchronous>, transform_indices = @transform_3, window_bounds = array<i64: 1, 32>}, {pipeline_mode = #tpu.pipeline_mode<synchronous>, transform_indices = @transform_4, window_bounds = array<i64: 1, 16>}, {pipeline_mode = #tpu.pipeline_mode<synchronous>, transform_indices = @transform_5, window_bounds = array<i64: 1, 16>}, {pipeline_mode = #tpu.pipeline_mode<synchronous>, transform_indices = @transform_6, window_bounds = array<i64: 32, 32>}, {pipeline_mode = #tpu.pipeline_mode<synchronous>, transform_indices = @transform_7, window_bounds = array<i64: 16, 32>}, {pipeline_mode = #tpu.pipeline_mode<synchronous>, transform_indices = @transform_8, window_bounds = array<i64: 1, 32>}, {transform_indices = @transform_9, window_bounds = array<i64: 8, 32>}]} {
    %c0 = arith.constant 0 : index
    %c0_0 = arith.constant 0 : index
    %0 = vector.load %arg1[%c0, %c0_0] : memref<8x32xf32, #tpu.memory_space<vmem>>, vector<8x32xf32>
    %c0_1 = arith.constant 0 : index
    %c0_2 = arith.constant 0 : index
    %1 = vector.load %arg3[%c0_1, %c0_2] : memref<1x32xf32, #tpu.memory_space<vmem>>, vector<1x32xf32>
    %c0_3 = arith.constant 0 : index
    %c0_4 = arith.constant 0 : index
    %2 = vector.load %arg4[%c0_3, %c0_4] : memref<1x32xf32, #tpu.memory_space<vmem>>, vector<1x32xf32>
    %cst = arith.constant dense<0.000000e+00> : vector<8xf32>
    %3 = vector.multi_reduction <add>, %0, %cst [1] : vector<8x32xf32> to vector<8xf32>
    %4 = vector.shape_cast %3 : vector<8xf32> to vector<8x1xf32>
    %5 = arith.mulf %0, %0 : vector<8x32xf32>
    %cst_5 = arith.constant dense<0.000000e+00> : vector<8xf32>
    %6 = vector.multi_reduction <add>, %5, %cst_5 [1] : vector<8x32xf32> to vector<8xf32>
    %7 = vector.shape_cast %6 : vector<8xf32> to vector<8x1xf32>
    %cst_6 = arith.constant 3.125000e-02 : f32
    %8 = vector.broadcast %cst_6 : f32 to vector<8x1xf32>
    %9 = arith.mulf %4, %8 : vector<8x1xf32>
    %cst_7 = arith.constant 3.125000e-02 : f32
    %10 = vector.broadcast %cst_7 : f32 to vector<8x1xf32>
    %11 = arith.mulf %7, %10 : vector<8x1xf32>
    %12 = arith.mulf %9, %9 : vector<8x1xf32>
    %13 = arith.subf %11, %12 : vector<8x1xf32>
    %cst_8 = arith.constant 9.99999974E-6 : f32
    %14 = vector.broadcast %cst_8 : f32 to vector<8x1xf32>
    %15 = arith.addf %13, %14 : vector<8x1xf32>
    %16 = math.rsqrt %15 : vector<8x1xf32>
    %17 = vector.broadcast %9 : vector<8x1xf32> to vector<8x32xf32>
    %18 = arith.subf %0, %17 : vector<8x32xf32>
    %19 = vector.broadcast %16 : vector<8x1xf32> to vector<8x32xf32>
    %20 = arith.mulf %18, %19 : vector<8x32xf32>
    %21 = vector.broadcast %1 : vector<1x32xf32> to vector<8x32xf32>
    %22 = arith.mulf %20, %21 : vector<8x32xf32>
    %23 = vector.broadcast %2 : vector<1x32xf32> to vector<8x32xf32>
    %24 = arith.addf %22, %23 : vector<8x32xf32>
    %c0_9 = arith.constant 0 : index
    %c0_10 = arith.constant 0 : index
    %25 = vector.load %arg2[%c0_9, %c0_10] : memref<8x16xf32, #tpu.memory_space<vmem>>, vector<8x16xf32>
    %c0_11 = arith.constant 0 : index
    %c0_12 = arith.constant 0 : index
    %26 = vector.load %arg5[%c0_11, %c0_12] : memref<1x16xf32, #tpu.memory_space<vmem>>, vector<1x16xf32>
    %c0_13 = arith.constant 0 : index
    %c0_14 = arith.constant 0 : index
    %27 = vector.load %arg6[%c0_13, %c0_14] : memref<1x16xf32, #tpu.memory_space<vmem>>, vector<1x16xf32>
    %cst_15 = arith.constant dense<0.000000e+00> : vector<8xf32>
    %28 = vector.multi_reduction <add>, %25, %cst_15 [1] : vector<8x16xf32> to vector<8xf32>
    %29 = vector.shape_cast %28 : vector<8xf32> to vector<8x1xf32>
    %30 = arith.mulf %25, %25 : vector<8x16xf32>
    %cst_16 = arith.constant dense<0.000000e+00> : vector<8xf32>
    %31 = vector.multi_reduction <add>, %30, %cst_16 [1] : vector<8x16xf32> to vector<8xf32>
    %32 = vector.shape_cast %31 : vector<8xf32> to vector<8x1xf32>
    %cst_17 = arith.constant 6.250000e-02 : f32
    %33 = vector.broadcast %cst_17 : f32 to vector<8x1xf32>
    %34 = arith.mulf %29, %33 : vector<8x1xf32>
    %cst_18 = arith.constant 6.250000e-02 : f32
    %35 = vector.broadcast %cst_18 : f32 to vector<8x1xf32>
    %36 = arith.mulf %32, %35 : vector<8x1xf32>
    %37 = arith.mulf %34, %34 : vector<8x1xf32>
    %38 = arith.subf %36, %37 : vector<8x1xf32>
    %cst_19 = arith.constant 9.99999974E-6 : f32
    %39 = vector.broadcast %cst_19 : f32 to vector<8x1xf32>
    %40 = arith.addf %38, %39 : vector<8x1xf32>
    %41 = math.rsqrt %40 : vector<8x1xf32>
    %42 = vector.broadcast %34 : vector<8x1xf32> to vector<8x16xf32>
    %43 = arith.subf %25, %42 : vector<8x16xf32>
    %44 = vector.broadcast %41 : vector<8x1xf32> to vector<8x16xf32>
    %45 = arith.mulf %43, %44 : vector<8x16xf32>
    %46 = vector.broadcast %26 : vector<1x16xf32> to vector<8x16xf32>
    %47 = arith.mulf %45, %46 : vector<8x16xf32>
    %48 = vector.broadcast %27 : vector<1x16xf32> to vector<8x16xf32>
    %49 = arith.addf %47, %48 : vector<8x16xf32>
    %c0_20 = arith.constant 0 : index
    %c0_21 = arith.constant 0 : index
    %50 = vector.load %arg7[%c0_20, %c0_21] : memref<32x32xf32, #tpu.memory_space<vmem>>, vector<32x32xf32>
    %cst_22 = arith.constant dense<0.000000e+00> : vector<8x32xf32>
    %51 = tpu.matmul %24, %50, %cst_22 {dimension_numbers = #tpu.dot_dimension_numbers<[1], [0], [0], [1], [0, 0, 1, 1], [], []>} : vector<8x32xf32>, vector<32x32xf32>, vector<8x32xf32> -> vector<8x32xf32>
    %c0_23 = arith.constant 0 : index
    %c0_24 = arith.constant 0 : index
    %52 = vector.load %arg8[%c0_23, %c0_24] : memref<16x32xf32, #tpu.memory_space<vmem>>, vector<16x32xf32>
    %cst_25 = arith.constant dense<0.000000e+00> : vector<8x32xf32>
    %53 = tpu.matmul %49, %52, %cst_25 {dimension_numbers = #tpu.dot_dimension_numbers<[1], [0], [0], [1], [0, 0, 1, 1], [], []>} : vector<8x16xf32>, vector<16x32xf32>, vector<8x32xf32> -> vector<8x32xf32>
    %54 = arith.addf %51, %53 : vector<8x32xf32>
    %c0_26 = arith.constant 0 : index
    %c0_27 = arith.constant 0 : index
    %55 = vector.load %arg9[%c0_26, %c0_27] : memref<1x32xf32, #tpu.memory_space<vmem>>, vector<1x32xf32>
    %56 = vector.broadcast %55 : vector<1x32xf32> to vector<8x32xf32>
    %57 = arith.addf %54, %56 : vector<8x32xf32>
    %c0_28 = arith.constant 0 : index
    %c0_29 = arith.constant 0 : index
    %58 = vector.load %arg10[%c0_28, %c0_29] : memref<8x32xf32, #tpu.memory_space<vmem>>, vector<8x32xf32>
    tpu.vector_store %arg10[%c0_28, %c0_29], %57 {strides = array<i32>} : memref<8x32xf32, #tpu.memory_space<vmem>>, vector<8x32xf32>,
    return
  }
  func.func @transform_0(%arg0: i32) -> (i32, i32) {
    %c0_i32 = arith.constant 0 : i32
    %c0_i32_0 = arith.constant 0 : i32
    return %arg0, %c0_i32 : i32, i32
  }
  func.func @transform_1(%arg0: i32) -> (i32, i32) {
    %c0_i32 = arith.constant 0 : i32
    %c0_i32_0 = arith.constant 0 : i32
    return %arg0, %c0_i32 : i32, i32
  }
  func.func @transform_2(%arg0: i32) -> (i32, i32) {
    %c0_i32 = arith.constant 0 : i32
    %c0_i32_0 = arith.constant 0 : i32
    %c0_i32_1 = arith.constant 0 : i32
    return %c0_i32, %c0_i32_0 : i32, i32
  }
  func.func @transform_3(%arg0: i32) -> (i32, i32) {
    %c0_i32 = arith.constant 0 : i32
    %c0_i32_0 = arith.constant 0 : i32
    %c0_i32_1 = arith.constant 0 : i32
    return %c0_i32, %c0_i32_0 : i32, i32
  }
  func.func @transform_4(%arg0: i32) -> (i32, i32) {
    %c0_i32 = arith.constant 0 : i32
    %c0_i32_0 = arith.constant 0 : i32
    %c0_i32_1 = arith.constant 0 : i32
    return %c0_i32, %c0_i32_0 : i32, i32
  }
  func.func @transform_5(%arg0: i32) -> (i32, i32) {
    %c0_i32 = arith.constant 0 : i32
    %c0_i32_0 = arith.constant 0 : i32
    %c0_i32_1 = arith.constant 0 : i32
    return %c0_i32, %c0_i32_0 : i32, i32
  }
  func.func @transform_6(%arg0: i32) -> (i32, i32) {
    %c0_i32 = arith.constant 0 : i32
    %c0_i32_0 = arith.constant 0 : i32
    %c0_i32_1 = arith.constant 0 : i32
    return %c0_i32, %c0_i32_0 : i32, i32
  }
  func.func @transform_7(%arg0: i32) -> (i32, i32) {
    %c0_i32 = arith.constant 0 : i32
    %c0_i32_0 = arith.constant 0 : i32
    %c0_i32_1 = arith.constant 0 : i32
    return %c0_i32, %c0_i32_0 : i32, i32
  }
  func.func @transform_8(%arg0: i32) -> (i32, i32) {
    %c0_i32 = arith.constant 0 : i32
    %c0_i32_0 = arith.constant 0 : i32
    %c0_i32_1 = arith.constant 0 : i32
    return %c0_i32, %c0_i32_0 : i32, i32
  }
  func.func @transform_9(%arg0: i32) -> (i32, i32) {
    %c0_i32 = arith.constant 0 : i32
    %c0_i32_0 = arith.constant 0 : i32
    return %arg0, %c0_i32 : i32, i32
  }
}

</mosaic_0001>

<llo_original>
// kernel: tpu_custom_call.1
$region0: #{tpu_custom_call.1}
  #allocation0 [shape = 'u32[]', space=smem, size = 0x4, offset = 0x4, fixed_abs, tag = 'smem constant byte address 0x4 - core index']
  #allocation1 [shape = 'u32[72,128]{1,0:T(1,128)}', space=vmem, size = 0x9000, scoped, tag = 'internal scratch']
  %s0 = inlined_call_operand.hbm [shape: f32[16,32], index: 0, kind: input, shape index: {}]
  %s1 = inlined_call_operand.hbm [shape: f32[16,16], index: 1, kind: input, shape index: {}]
  %s2 = inlined_call_operand.vmem [shape: f32[1,32], index: 2, kind: input, shape index: {}]
  %s3 = inlined_call_operand.vmem [shape: f32[1,32], index: 3, kind: input, shape index: {}]
  %s4 = inlined_call_operand.vmem [shape: f32[1,16], index: 4, kind: input, shape index: {}]
  %s5 = inlined_call_operand.vmem [shape: f32[1,16], index: 5, kind: input, shape index: {}]
  %s6 = inlined_call_operand.hbm [shape: f32[32,32], index: 6, kind: input, shape index: {}]
  %s7 = inlined_call_operand.hbm [shape: f32[16,32], index: 7, kind: input, shape index: {}]
  %s8 = inlined_call_operand.vmem [shape: f32[1,32], index: 8, kind: input, shape index: {}]
  %s9 = inlined_call_operand.hbm [shape: f32[16,32], index: 9, kind: output, shape index: {}]
  %s10 = sld [smem:[#allocation0]]
  $region85: #{tpu_custom_call.1} parent=0
    _
  %s12 = ssub.s32 1, %s10
  %s13 = scalar_select 0, %s12, %s10
  $region1: #{tpu_custom_call.1} parent=0
    #allocation2 [shape = 'u8[8192]{0}', space=vmem, size = 0x2000, scoped, tag = 'input window, operand 0']
    #allocation3 [shape = 's32[2]{0}', space=sflag, size = 0x8, scoped, tag = 'scoped memory for tpu_custom_call.1']
    #allocation4 [shape = 's32[2]{0}', space=sflag, size = 0x8, scoped, tag = 'scoped memory for tpu_custom_call.1']
    #allocation5 [shape = 'u8[8192]{0}', space=vmem, size = 0x2000, scoped, tag = 'input window, operand 1']
    #allocation6 [shape = 's32[2]{0}', space=sflag, size = 0x8, scoped, tag = 'scoped memory for tpu_custom_call.1']
    #allocation7 [shape = 'u8[16384]{0}', space=vmem, size = 0x4000, scoped, tag = 'input window, operand 6, single buffered']
    #allocation8 [shape = 'u8[8192]{0}', space=vmem, size = 0x2000, scoped, tag = 'input window, operand 7, single buffered']
    #allocation9 [shape = 's32[1]{0}', space=sflag, size = 0x4, scoped, tag = 'scoped memory for tpu_custom_call.1']
    #allocation10 [shape = 'u8[8192]{0}', space=vmem, size = 0x2000, scoped, tag = 'output window, operand 0']
    %14 = vsyncpa [#allocation3], 0
    %s15 = scalar_lea.sflag [#allocation3], 1
    %16 = vsyncpa %s15, 0
    %17 = vsyncpa [#allocation6], 0
    %s18 = scalar_lea.sflag [#allocation6], 1
    %19 = vsyncpa %s18, 0
    %20 = vsyncpa [#allocation9], 0
    %21 = vsyncpa [#allocation4], 0
    %s22 = scalar_lea.sflag [#allocation4], 1
    %23 = vsyncpa %s22, 0
    loop: start=0, step=1, limit=4
    $region2: #{tpu_custom_call.1} parent=1 // loop_pre_header
      _
    $region3: #{tpu_custom_call.1} parent=1 // loop_header
      %s25 = sphi 0, %s29
      %p26 = scmp.ge.s32.totalorder %s25, 4
      %s35 = sphi 0, %s37
      %s38 = sphi 0, %s35
      %s39 = sphi 0, %s38
      %s55 = sphi 0, %s39
      %s61 = sphi 0, %s63
      %s64 = sphi 0, %s61
      %s65 = sphi 0, %s64
      %s81 = sphi 0, %s65
      %s85 = sphi 0, %s85
      %s87 = sphi 0, %s85
      %s88 = sphi 0, %s87
      %s102 = sphi 0, %s88
      %s106 = sphi 0, %s106
      %s108 = sphi 0, %s106
      %s109 = sphi 0, %s108
      %s123 = sphi 0, %s109
      %s127 = sphi 0, %s127
      %s129 = sphi 0, %s127
      %s130 = sphi 0, %s129
      %s144 = sphi 0, %s130
      %s148 = sphi 0, %s148
      %s150 = sphi 0, %s148
      %s151 = sphi 0, %s150
      %s165 = sphi 0, %s151
      %s169 = sphi 0, %s169
      %s171 = sphi 0, %s169
      %s172 = sphi 0, %s171
      %s186 = sphi 0, %s172
      %s190 = sphi 0, %s190
      %s192 = sphi 0, %s190
      %s193 = sphi 0, %s192
      %s207 = sphi 0, %s193
      %s211 = sphi 0, %s211
      %s213 = sphi 0, %s211
      %s214 = sphi 0, %s213
      %s228 = sphi 0, %s214
      %s234 = sphi 0, %s236
      %s237 = sphi 0, %s234
      %s238 = sphi 0, %s237
      %s254 = sphi 0, %s238
    $region4: #{tpu_custom_call.1} parent=1 // loop_header_branch
      %28 = sbr.rel (%p26) target = $region8
    $region5: #{tpu_custom_call.1} parent=1 // loop_body
      %s30 = ssub.s32 %s25, 1
      %s31 = ssub.s32 %s25, 2
      %s32 = sadd.s32 %s25, 1
      %s33 = ssub.s32 %s25, %s32
      %p34 = scmp.eq.s32.totalorder %s33, 0
      %s36 = sadd.s32 %s35, 1
      %s37 = scalar_select %p34, %s35, %s36
      %p40 = pneg %p34
      %p41 = scmp.eq.s32.totalorder %s25, 1
      %p42 = por %p40, %p41
      %p43 = scmp.ne.s32.totalorder %s35, %s38
      %p44 = scmp.eq.s32.totalorder %s25, 0
      %p45 = por %p43, %p44
      %p46 = scmp.ne.s32.totalorder %s35, %s38
      %p47 = scmp.eq.s32.totalorder %s30, 1
      %p48 = por %p46, %p47
      %p49 = scmp.ne.s32.totalorder %s38, %s39
      %p50 = scmp.eq.s32.totalorder %s30, 0
      %p51 = por %p49, %p50
      %p52 = scmp.ne.s32.totalorder %s38, %s39
      %p53 = scmp.eq.s32.totalorder %s31, 1
      %p54 = por %p52, %p53
      %p56 = scmp.ne.s32.totalorder %s39, %s55
      %p57 = scmp.eq.s32.totalorder %s31, 0
      %p58 = por %p56, %p57
      %s59 = ssub.s32 %s25, %s32
      %p60 = scmp.eq.s32.totalorder %s59, 0
      %s62 = sadd.s32 %s61, 1
      %s63 = scalar_select %p60, %s61, %s62
      %p66 = pneg %p60
      %p67 = scmp.eq.s32.totalorder %s25, 1
      %p68 = por %p66, %p67
      %p69 = scmp.ne.s32.totalorder %s61, %s64
      %p70 = scmp.eq.s32.totalorder %s25, 0
      %p71 = por %p69, %p70
      %p72 = scmp.ne.s32.totalorder %s61, %s64
      %p73 = scmp.eq.s32.totalorder %s30, 1
      %p74 = por %p72, %p73
      %p75 = scmp.ne.s32.totalorder %s64, %s65
      %p76 = scmp.eq.s32.totalorder %s30, 0
      %p77 = por %p75, %p76
      %p78 = scmp.ne.s32.totalorder %s64, %s65
      %p79 = scmp.eq.s32.totalorder %s31, 1
      %p80 = por %p78, %p79
      %p82 = scmp.ne.s32.totalorder %s65, %s81
      %p83 = scmp.eq.s32.totalorder %s31, 0
      %p84 = por %p82, %p83
      %s86 = sadd.s32 %s85, 1
      %p89 = scmp.eq.s32.totalorder %s25, 1
      %p90 = scmp.ne.s32.totalorder %s85, %s87
      %p91 = scmp.eq.s32.totalorder %s25, 0
      %p92 = por %p90, %p91
      %p93 = scmp.ne.s32.totalorder %s85, %s87
      %p94 = scmp.eq.s32.totalorder %s30, 1
      %p95 = por %p93, %p94
      %p96 = scmp.ne.s32.totalorder %s87, %s88
      %p97 = scmp.eq.s32.totalorder %s30, 0
      %p98 = por %p96, %p97
      %p99 = scmp.ne.s32.totalorder %s87, %s88
      %p100 = scmp.eq.s32.totalorder %s31, 1
      %p101 = por %p99, %p100
      %p103 = scmp.ne.s32.totalorder %s88, %s102
      %p104 = scmp.eq.s32.totalorder %s31, 0
      %p105 = por %p103, %p104
      %s107 = sadd.s32 %s106, 1
      %p110 = scmp.eq.s32.totalorder %s25, 1
      %p111 = scmp.ne.s32.totalorder %s106, %s108
      %p112 = scmp.eq.s32.totalorder %s25, 0
      %p113 = por %p111, %p112
      %p114 = scmp.ne.s32.totalorder %s106, %s108
      %p115 = scmp.eq.s32.totalorder %s30, 1
      %p116 = por %p114, %p115
      %p117 = scmp.ne.s32.totalorder %s108, %s109
      %p118 = scmp.eq.s32.totalorder %s30, 0
      %p119 = por %p117, %p118
      %p120 = scmp.ne.s32.totalorder %s108, %s109
      %p121 = scmp.eq.s32.totalorder %s31, 1
      %p122 = por %p120, %p121
      %p124 = scmp.ne.s32.totalorder %s109, %s123
      %p125 = scmp.eq.s32.totalorder %s31, 0
      %p126 = por %p124, %p125
      %s128 = sadd.s32 %s127, 1
      %p131 = scmp.eq.s32.totalorder %s25, 1
      %p132 = scmp.ne.s32.totalorder %s127, %s129
      %p133 = scmp.eq.s32.totalorder %s25, 0
      %p134 = por %p132, %p133
      %p135 = scmp.ne.s32.totalorder %s127, %s129
      %p136 = scmp.eq.s32.totalorder %s30, 1
      %p137 = por %p135, %p136
      %p138 = scmp.ne.s32.totalorder %s129, %s130
      %p139 = scmp.eq.s32.totalorder %s30, 0
      %p140 = por %p138, %p139
      %p141 = scmp.ne.s32.totalorder %s129, %s130
      %p142 = scmp.eq.s32.totalorder %s31, 1
      %p143 = por %p141, %p142
      %p145 = scmp.ne.s32.totalorder %s130, %s144
      %p146 = scmp.eq.s32.totalorder %s31, 0
      %p147 = por %p145, %p146
      %s149 = sadd.s32 %s148, 1
      %p152 = scmp.eq.s32.totalorder %s25, 1
      %p153 = scmp.ne.s32.totalorder %s148, %s150
      %p154 = scmp.eq.s32.totalorder %s25, 0
      %p155 = por %p153, %p154
      %p156 = scmp.ne.s32.totalorder %s148, %s150
      %p157 = scmp.eq.s32.totalorder %s30, 1
      %p158 = por %p156, %p157
      %p159 = scmp.ne.s32.totalorder %s150, %s151
      %p160 = scmp.eq.s32.totalorder %s30, 0
      %p161 = por %p159, %p160
      %p162 = scmp.ne.s32.totalorder %s150, %s151
      %p163 = scmp.eq.s32.totalorder %s31, 1
      %p164 = por %p162, %p163
      %p166 = scmp.ne.s32.totalorder %s151, %s165
      %p167 = scmp.eq.s32.totalorder %s31, 0
      %p168 = por %p166, %p167
      %s170 = sadd.s32 %s169, 1
      %p173 = scmp.eq.s32.totalorder %s25, 1
      %p174 = scmp.ne.s32.totalorder %s169, %s171
      %p175 = scmp.eq.s32.totalorder %s25, 0
      %p176 = por %p174, %p175
      %p177 = scmp.ne.s32.totalorder %s169, %s171
      %p178 = scmp.eq.s32.totalorder %s30, 1
      %p179 = por %p177, %p178
      %p180 = scmp.ne.s32.totalorder %s171, %s172
      %p181 = scmp.eq.s32.totalorder %s30, 0
      %p182 = por %p180, %p181
      %p183 = scmp.ne.s32.totalorder %s171, %s172
      %p184 = scmp.eq.s32.totalorder %s31, 1
      %p185 = por %p183, %p184
      %p187 = scmp.ne.s32.totalorder %s172, %s186
      %p188 = scmp.eq.s32.totalorder %s31, 0
      %p189 = por %p187, %p188
      %s191 = sadd.s32 %s190, 1
      %p194 = scmp.eq.s32.totalorder %s25, 1
      %p195 = scmp.ne.s32.totalorder %s190, %s192
      %p196 = scmp.eq.s32.totalorder %s25, 0
      %p197 = por %p195, %p196
      %p198 = scmp.ne.s32.totalorder %s190, %s192
      %p199 = scmp.eq.s32.totalorder %s30, 1
      %p200 = por %p198, %p199
      %p201 = scmp.ne.s32.totalorder %s192, %s193
      %p202 = scmp.eq.s32.totalorder %s30, 0
      %p203 = por %p201, %p202
      %p204 = scmp.ne.s32.totalorder %s192, %s193
      %p205 = scmp.eq.s32.totalorder %s31, 1
      %p206 = por %p204, %p205
      %p208 = scmp.ne.s32.totalorder %s193, %s207
      %p209 = scmp.eq.s32.totalorder %s31, 0
      %p210 = por %p208, %p209
      %s212 = sadd.s32 %s211, 1
      %p215 = scmp.eq.s32.totalorder %s25, 1
      %p216 = scmp.ne.s32.totalorder %s211, %s213
      %p217 = scmp.eq.s32.totalorder %s25, 0
      %p218 = por %p216, %p217
      %p219 = scmp.ne.s32.totalorder %s211, %s213
      %p220 = scmp.eq.s32.totalorder %s30, 1
      %p221 = por %p219, %p220
      %p222 = scmp.ne.s32.totalorder %s213, %s214
      %p223 = scmp.eq.s32.totalorder %s30, 0
      %p224 = por %p222, %p223
      %p225 = scmp.ne.s32.totalorder %s213, %s214
      %p226 = scmp.eq.s32.totalorder %s31, 1
      %p227 = por %p225, %p226
      %p229 = scmp.ne.s32.totalorder %s214, %s228
      %p230 = scmp.eq.s32.totalorder %s31, 0
      %p231 = por %p229, %p230
      %s232 = ssub.s32 %s25, %s32
      %p233 = scmp.eq.s32.totalorder %s232, 0
      %s235 = sadd.s32 %s234, 1
      %s236 = scalar_select %p233, %s234, %s235
      %p239 = pneg %p233
      %p240 = scmp.eq.s32.totalorder %s25, 1
      %p241 = por %p239, %p240
      %p242 = scmp.ne.s32.totalorder %s234, %s237
      %p243 = scmp.eq.s32.totalorder %s25, 0
      %p244 = por %p242, %p243
      %p245 = scmp.ne.s32.totalorder %s234, %s237
      %p246 = scmp.eq.s32.totalorder %s30, 1
      %p247 = por %p245, %p246
      %p248 = scmp.ne.s32.totalorder %s237, %s238
      %p249 = scmp.eq.s32.totalorder %s30, 0
      %p250 = por %p248, %p249
      %p251 = scmp.ne.s32.totalorder %s237, %s238
      %p252 = scmp.eq.s32.totalorder %s31, 1
      %p253 = por %p251, %p252
      %p255 = scmp.ne.s32.totalorder %s238, %s254
      %p256 = scmp.eq.s32.totalorder %s31, 0
      %p257 = por %p255, %p256
      %p258 = scmp.le.s32.totalorder 1, %s25
      %p259 = scmp.lt.s32.totalorder %s25, 3
      %p260 = pnand %p258, %p259
      %p261 = pneg %p260
      // Predicated region
      $region9: #{tpu_custom_call.1} parent=5 // pred_check
        _
      $region10: #{tpu_custom_call.1} parent=5 // pred_check_branch
        %263 = sbr.rel (%p260) target = $region12
      $region11: #{tpu_custom_call.1} parent=5 // pred_region
        %s264 = ssub.s32 %s25, 1
        // Predicated region
        $region13: #{tpu_custom_call.1} parent=11 // pred_check
          %p265 = pneg %p98
        $region14: #{tpu_custom_call.1} parent=11 // pred_check_branch
          %267 = sbr.rel (%p265) target = $region16
        $region15: #{tpu_custom_call.1} parent=11 // pred_region
          _
        $region16: #{tpu_custom_call.1} parent=11 // pred_fallthru
          _
        // Predicated region
        $region17: #{tpu_custom_call.1} parent=11 // pred_check
          %p268 = pneg %p119
        $region18: #{tpu_custom_call.1} parent=11 // pred_check_branch
          %270 = sbr.rel (%p268) target = $region20
        $region19: #{tpu_custom_call.1} parent=11 // pred_region
          _
        $region20: #{tpu_custom_call.1} parent=11 // pred_fallthru
          _
        // Predicated region
        $region21: #{tpu_custom_call.1} parent=11 // pred_check
          %p271 = pneg %p140
        $region22: #{tpu_custom_call.1} parent=11 // pred_check_branch
          %273 = sbr.rel (%p271) target = $region24
        $region23: #{tpu_custom_call.1} parent=11 // pred_region
          _
        $region24: #{tpu_custom_call.1} parent=11 // pred_fallthru
          _
        // Predicated region
        $region25: #{tpu_custom_call.1} parent=11 // pred_check
          %p274 = pneg %p161
        $region26: #{tpu_custom_call.1} parent=11 // pred_check_branch
          %276 = sbr.rel (%p274) target = $region28
        $region27: #{tpu_custom_call.1} parent=11 // pred_region
          _
        $region28: #{tpu_custom_call.1} parent=11 // pred_fallthru
          _
        // Predicated region
        $region29: #{tpu_custom_call.1} parent=11 // pred_check
          %p277 = pneg %p182
        $region30: #{tpu_custom_call.1} parent=11 // pred_check_branch
          %279 = sbr.rel (%p277) target = $region32
        $region31: #{tpu_custom_call.1} parent=11 // pred_region
          %281 = vsyncadd [#allocation6], 0
          %s282 = sshll.u32 %s6, 4
          %s283 = int_to_ptr.hbm [resolvable:$true] %s282
          %s284 = sshll.u32 [#allocation7], 4
          %s285 = int_to_ptr.vmem [resolvable:$true] %s284
          %290 = dma.hbm_to_vmem [thread:$0]  %s283, 512, %s285, [#allocation6], 128, 128, 8
        $region32: #{tpu_custom_call.1} parent=11 // pred_fallthru
          _
        // Predicated region
        $region33: #{tpu_custom_call.1} parent=11 // pred_check
          %p291 = pneg %p203
        $region34: #{tpu_custom_call.1} parent=11 // pred_check_branch
          %293 = sbr.rel (%p291) target = $region36
        $region35: #{tpu_custom_call.1} parent=11 // pred_region
          %295 = vsyncadd [#allocation9], 0
          %s296 = sshll.u32 %s7, 4
          %s297 = int_to_ptr.hbm [resolvable:$true] %s296
          %s298 = sshll.u32 [#allocation8], 4
          %s299 = int_to_ptr.vmem [resolvable:$true] %s298
          %304 = dma.hbm_to_vmem [thread:$0]  %s297, 256, %s299, [#allocation9], 128, 128, 8
        $region36: #{tpu_custom_call.1} parent=11 // pred_fallthru
          _
        // Predicated region
        $region37: #{tpu_custom_call.1} parent=11 // pred_check
          %p305 = pneg %p224
        $region38: #{tpu_custom_call.1} parent=11 // pred_check_branch
          %307 = sbr.rel (%p305) target = $region40
        $region39: #{tpu_custom_call.1} parent=11 // pred_region
          _
        $region40: #{tpu_custom_call.1} parent=11 // pred_fallthru
          _
      $region12: #{tpu_custom_call.1} parent=5 // pred_fallthru
        _
      %p308 = scmp.lt.s32.totalorder %s25, 2
      // Predicated region
      $region41: #{tpu_custom_call.1} parent=5 // pred_check
        %p309 = pneg %p308
      $region42: #{tpu_custom_call.1} parent=5 // pred_check_branch
        %311 = sbr.rel (%p309) target = $region44
      $region43: #{tpu_custom_call.1} parent=5 // pred_region
        // Predicated region
        $region45: #{tpu_custom_call.1} parent=43 // pred_check
          %p312 = pneg %p45
        $region46: #{tpu_custom_call.1} parent=43 // pred_check_branch
          %314 = sbr.rel (%p312) target = $region48
        $region47: #{tpu_custom_call.1} parent=43 // pred_region
          %s315 = sand.u32 %s35, 1
          %s316 = scalar_lea.sflag [#allocation3], %s315
          %s317 = sand.u32 %s35, 1
          %s318 = smul.addr %s317, 8
          %s319 = scalar_lea.vmem [#allocation2], %s318
          %321 = vsyncadd %s316, 0
          %s322 = smul.addr %s25, 8
          %s323 = scalar_lea.hbm %s0, %s322
          %s325 = sshll.u32 %s323, 4
          %s326 = int_to_ptr.hbm [resolvable:$true] %s325
          %s327 = sshll.u32 %s319, 4
          %s328 = int_to_ptr.vmem [resolvable:$true] %s327
          %330 = dma.hbm_to_vmem [thread:$0]  %s326, 128, %s328, %s316
        $region48: #{tpu_custom_call.1} parent=43 // pred_fallthru
          _
        // Predicated region
        $region49: #{tpu_custom_call.1} parent=43 // pred_check
          %p331 = pneg %p71
        $region50: #{tpu_custom_call.1} parent=43 // pred_check_branch
          %333 = sbr.rel (%p331) target = $region52
        $region51: #{tpu_custom_call.1} parent=43 // pred_region
          %s334 = sand.u32 %s25, 1
          %s335 = scalar_lea.sflag [#allocation6], %s334
          %s336 = sand.u32 %s61, 1
          %s337 = smul.addr %s336, 8
          %s338 = scalar_lea.vmem [#allocation5], %s337
          %340 = vsyncadd %s335, 0
          %s341 = smul.addr %s25, 8
          %s342 = scalar_lea.hbm %s1, %s341
          %s344 = sshll.u32 %s342, 4
          %s345 = int_to_ptr.hbm [resolvable:$true] %s344
          %s346 = sshll.u32 %s338, 4
          %s347 = int_to_ptr.vmem [resolvable:$true] %s346
          %349 = dma.hbm_to_vmem [thread:$0]  %s345, 128, %s347, %s335
        $region52: #{tpu_custom_call.1} parent=43 // pred_fallthru
          _
      $region44: #{tpu_custom_call.1} parent=5 // pred_fallthru
        _
      %p350 = scmp.le.s32.totalorder 1, %s25
      %p351 = scmp.lt.s32.totalorder %s25, 3
      %p352 = pnand %p350, %p351
      %p353 = pneg %p352
      // Predicated region
      $region53: #{tpu_custom_call.1} parent=5 // pred_check
        _
      $region54: #{tpu_custom_call.1} parent=5 // pred_check_branch
        %355 = sbr.rel (%p352) target = $region56
      $region55: #{tpu_custom_call.1} parent=5 // pred_region
        %s356 = ssub.s32 %s25, 1
        %s357 = sand.u32 %s38, 1
        %s358 = scalar_lea.sflag [#allocation3], %s357
        %s359 = sand.u32 %s38, 1
        %s360 = smul.addr %s359, 8
        %s361 = scalar_lea.vmem [#allocation2], %s360
        // Predicated region
        $region57: #{tpu_custom_call.1} parent=55 // pred_check
          %p362 = pneg %p51
        $region58: #{tpu_custom_call.1} parent=55 // pred_check_branch
          %364 = sbr.rel (%p362) target = $region60
        $region59: #{tpu_custom_call.1} parent=55 // pred_region
          %366 = dma.done %s358, 128
        $region60: #{tpu_custom_call.1} parent=55 // pred_fallthru
          _
        %s367 = sand.u32 %s30, 1
        %s368 = scalar_lea.sflag [#allocation6], %s367
        %s369 = sand.u32 %s64, 1
        %s370 = smul.addr %s369, 8
        %s371 = scalar_lea.vmem [#allocation5], %s370
        // Predicated region
        $region61: #{tpu_custom_call.1} parent=55 // pred_check
          %p372 = pneg %p77
        $region62: #{tpu_custom_call.1} parent=55 // pred_check_branch
          %374 = sbr.rel (%p372) target = $region64
        $region63: #{tpu_custom_call.1} parent=55 // pred_region
          %376 = dma.done %s368, 128
        $region64: #{tpu_custom_call.1} parent=55 // pred_fallthru
          _
        // Predicated region
        $region65: #{tpu_custom_call.1} parent=55 // pred_check
          %p377 = pneg %p182
        $region66: #{tpu_custom_call.1} parent=55 // pred_check_branch
          %379 = sbr.rel (%p377) target = $region68
        $region67: #{tpu_custom_call.1} parent=55 // pred_region
          %381 = dma.done [#allocation6], 512
        $region68: #{tpu_custom_call.1} parent=55 // pred_fallthru
          _
        // Predicated region
        $region69: #{tpu_custom_call.1} parent=55 // pred_check
          %p382 = pneg %p203
        $region70: #{tpu_custom_call.1} parent=55 // pred_check_branch
          %384 = sbr.rel (%p382) target = $region72
        $region71: #{tpu_custom_call.1} parent=55 // pred_region
          %386 = dma.done [#allocation9], 256
        $region72: #{tpu_custom_call.1} parent=55 // pred_fallthru
          _
        %s387 = sand.u32 %s38, 1
        %s388 = scalar_lea.sflag [#allocation3], %s387
        %s389 = sand.u32 %s38, 1
        %s390 = smul.addr %s389, 8
        %s391 = scalar_lea.vmem [#allocation2], %s390
        %p392 = pneg %p51
        %p393 = pneg %p48
        %s394 = sand.u32 %s30, 1
        %s395 = scalar_lea.sflag [#allocation6], %s394
        %s396 = sand.u32 %s64, 1
        %s397 = smul.addr %s396, 8
        %s398 = scalar_lea.vmem [#allocation5], %s397
        %p399 = pneg %p77
        %p400 = pneg %p74
        %p401 = pneg %p98
        %p402 = pneg %p95
        %p403 = pneg %p119
        %p404 = pneg %p116
        %p405 = pneg %p140
        %p406 = pneg %p137
        %p407 = pneg %p161
        %p408 = pneg %p158
        %p409 = pneg %p182
        %p410 = pneg %p179
        %p411 = pneg %p203
        %p412 = pneg %p200
        %p413 = pneg %p224
        %p414 = pneg %p221
        %p415 = pneg %p250
        %p416 = pneg %p247
        %s417 = sand.u32 %s237, 1
        %s418 = scalar_lea.sflag [#allocation4], %s417
        %s419 = sand.u32 %s237, 1
        %s420 = smul.addr %s419, 8
        %s421 = scalar_lea.vmem [#allocation10], %s420
        %v422 = vld [vmem:[%s361] sm:$0xff]
        %v423 = vld [vmem:[%s2] sm:$0x1]
        %v424 = vld [vmem:[%s3] sm:$0x1]
        %vm425 = vcmask 261120
        %v426 = vsel %vm425, %v422, 0.0
        %427 = vadd.xlane.f32.xlu0 %v426
        %v428 = vpop.xlane.xlu0 %427
        %v429 = vmul.f32 %v422, %v422
        %v430 = vsel %vm425, %v429, 0.0
        %431 = vadd.xlane.f32.xlu0 %v430
        %v432 = vpop.xlane.xlu0 %431
        %v433 = vmul.f32 %v428, 0.03125
        %v434 = vmul.f32 %v432, 0.03125
        %v435 = vmul.f32 %v433, %v433
        %v436 = vsub.f32 %v434, %v435
        %v437 = vadd.f32 %v436, 1e-05
        %v438 = vrsqrt.pop %v437
        %v439 = vmul.f32 %v438, %v437
        %v440 = vmul.f32 %v439, %v438
        %v441 = vmul.f32 0.5, %v440
        %v442 = vsub.f32 1.5, %v441
        %v443 = vmul.f32 %v438, %v442
        %vm444 = vweird.f32 %v437
        %vm445 = vweird.f32 %v438
        %vm446 = vmor %vm444, %vm445
        %v447 = vsel %vm446, %v438, %v443
        %v448 = vsub.f32 %v422, %v433
        %v449 = vmul.f32 %v448, %v447
        %v451 = vperm.slane %v423, 0
        %v453 = vmul.f32 %v449, %v451
        %v455 = vperm.slane %v424, 0
        %v457 = vadd.f32 %v453, %v455
        %v458 = vld [vmem:[%s371] sm:$0xff]
        %v459 = vld [vmem:[%s4] sm:$0x1]
        %v460 = vld [vmem:[%s5] sm:$0x1]
        %vm461 = vcmask 130048
        %v462 = vsel %vm461, %v458, 0.0
        %463 = vadd.xlane.f32.xlu0 %v462
        %v464 = vpop.xlane.xlu0 %463
        %v465 = vmul.f32 %v458, %v458
        %v466 = vsel %vm461, %v465, 0.0
        %467 = vadd.xlane.f32.xlu0 %v466
        %v468 = vpop.xlane.xlu0 %467
        %v469 = vmul.f32 %v464, 0.0625
        %v470 = vmul.f32 %v468, 0.0625
        %v471 = vmul.f32 %v469, %v469
        %v472 = vsub.f32 %v470, %v471
        %v473 = vadd.f32 %v472, 1e-05
        %v474 = vrsqrt.pop %v473
        %v475 = vmul.f32 %v474, %v473
        %v476 = vmul.f32 %v475, %v474
        %v477 = vmul.f32 0.5, %v476
        %v478 = vsub.f32 1.5, %v477
        %v479 = vmul.f32 %v474, %v478
        %vm480 = vweird.f32 %v473
        %vm481 = vweird.f32 %v474
        %vm482 = vmor %vm480, %vm481
        %v483 = vsel %vm482, %v474, %v479
        %v484 = vsub.f32 %v458, %v469
        %v485 = vmul.f32 %v484, %v483
        %v487 = vperm.slane %v459, 0
        %v489 = vmul.f32 %v485, %v487
        %v491 = vperm.slane %v460, 0
        %v493 = vadd.f32 %v489, %v491
        %v494 = vld [vmem:[#allocation7] sm:$0xff]
        %v495 = vld [vmem:[#allocation7 + $0x8] sm:$0xff]
        %v496 = vld [vmem:[#allocation7 + $0x10] sm:$0xff]
        %v497 = vld [vmem:[#allocation7 + $0x18] sm:$0xff]
        %v498 = vld [vmem:[#allocation8] sm:$0xff]
        %v499 = vld [vmem:[#allocation8 + $0x8] sm:$0xff]
        %v501 = vsel %vm461, %v493, 0
        %503 = vmatpush.msra.mxu0 0.0
        %504 = vmatpush.msra.mxu0 0.0
        %505 = vmatpush.msra.mxu0 0.0
        %506 = vmatpush.msra.mxu0 0.0
        %507 = vmatpush.msra.mxu0 0.0
        %508 = vmatpush.msra.mxu0 0.0
        %509 = vmatpush.msra.mxu0 0.0
        %510 = vmatpush.msra.mxu0 0.0
        %511 = vmatpush.msra.mxu0 0.0
        %512 = vmatpush.msra.mxu0 0.0
        %513 = vmatpush.msra.mxu0 0.0
        %514 = vmatpush.msra.mxu0 0.0
        %515 = vmatpush.msra.mxu0 0.0
        %516 = vmatpush.msra.mxu0 0.0
        %517 = vmatpush.msra.mxu0 %v499
        %518 = vmatpush.msra.mxu0 %v498
        %519 = vmatmul.f32.gmra.mxu0 %v501
        %v520 = vpop.f32.mrf.mxu0
        %v521 = vadd.f32 0.0, %v520
        %522 = vdwg.mxu0
        %v524 = vsel %vm425, %v457, 0
        %526 = vmatpush.msra.mxu0 0.0
        %527 = vmatpush.msra.mxu0 0.0
        %528 = vmatpush.msra.mxu0 0.0
        %529 = vmatpush.msra.mxu0 0.0
        %530 = vmatpush.msra.mxu0 0.0
        %531 = vmatpush.msra.mxu0 0.0
        %532 = vmatpush.msra.mxu0 0.0
        %533 = vmatpush.msra.mxu0 0.0
        %534 = vmatpush.msra.mxu0 0.0
        %535 = vmatpush.msra.mxu0 0.0
        %536 = vmatpush.msra.mxu0 0.0
        %537 = vmatpush.msra.mxu0 0.0
        %538 = vmatpush.msra.mxu0 %v497
        %539 = vmatpush.msra.mxu0 %v496
        %540 = vmatpush.msra.mxu0 %v495
        %541 = vmatpush.msra.mxu0 %v494
        %542 = vmatmul.f32.gmra.mxu0 %v524
        %v543 = vpop.f32.mrf.mxu0
        %v544 = vadd.f32 %v521, %v543
        %545 = vdwg.mxu0
        %v546 = vld [vmem:[%s8] sm:$0x1]
        %v548 = vperm.slane %v546, 0
        %v550 = vadd.f32 %v544, %v548
        %551 = vst.msk [vmem:[%s421] sm:$0xff] %vm425, %v550
        %s552 = sand.u32 %s237, 1
        %s553 = scalar_lea.sflag [#allocation4], %s552
        %s554 = sand.u32 %s237, 1
        %s555 = smul.addr %s554, 8
        %s556 = scalar_lea.vmem [#allocation10], %s555
        // Predicated region
        $region73: #{tpu_custom_call.1} parent=55 // pred_check
          %p557 = pneg %p247
        $region74: #{tpu_custom_call.1} parent=55 // pred_check_branch
          %559 = sbr.rel (%p557) target = $region76
        $region75: #{tpu_custom_call.1} parent=55 // pred_region
          %561 = vsyncadd %s553, 0
          %s562 = smul.addr %s30, 8
          %s563 = scalar_lea.hbm %s9, %s562
          %s565 = sshll.u32 %s556, 4
          %s566 = int_to_ptr.vmem [resolvable:$true] %s565
          %s567 = sshll.u32 %s563, 4
          %s568 = int_to_ptr.hbm [resolvable:$true] %s567
          %570 = dma.vmem_to_hbm [thread:$0]  %s566, 128, %s568, %s553
        $region76: #{tpu_custom_call.1} parent=55 // pred_fallthru
          _
      $region56: #{tpu_custom_call.1} parent=5 // pred_fallthru
        _
      %p571 = scmp.le.s32.totalorder 2, %s25
      // Predicated region
      $region77: #{tpu_custom_call.1} parent=5 // pred_check
        %p572 = pneg %p571
      $region78: #{tpu_custom_call.1} parent=5 // pred_check_branch
        %574 = sbr.rel (%p572) target = $region80
      $region79: #{tpu_custom_call.1} parent=5 // pred_region
        %s575 = ssub.s32 %s25, 2
        // Predicated region
        $region81: #{tpu_custom_call.1} parent=79 // pred_check
          %p576 = pneg %p253
        $region82: #{tpu_custom_call.1} parent=79 // pred_check_branch
          %578 = sbr.rel (%p576) target = $region84
        $region83: #{tpu_custom_call.1} parent=79 // pred_region
          %s579 = sand.u32 %s238, 1
          %s580 = scalar_lea.sflag [#allocation4], %s579
          %s581 = sand.u32 %s238, 1
          %s582 = smul.addr %s581, 8
          %s583 = scalar_lea.vmem [#allocation10], %s582
          %585 = dma.done %s580, 128
        $region84: #{tpu_custom_call.1} parent=79 // pred_fallthru
          _
      $region80: #{tpu_custom_call.1} parent=5 // pred_fallthru
        _
    $region6: #{tpu_custom_call.1} parent=1 // loop_footer
      %s29 = sadd.s32 1, %s25
    $region7: #{tpu_custom_call.1} parent=1 // loop_footer_branch
      %24 = sbr.rel target = $region3
    $region8: #{tpu_custom_call.1} parent=1 // loop_exit
      _
    %586 = vsyncpa [#allocation3], 1
    %s587 = scalar_lea.sflag [#allocation3], 1
    %588 = vsyncpa %s587, 1
    %589 = vsyncpa [#allocation6], 1
    %s590 = scalar_lea.sflag [#allocation6], 1
    %591 = vsyncpa %s590, 1
    %592 = vsyncpa [#allocation9], 1
    %593 = vsyncpa [#allocation4], 1
    %s594 = scalar_lea.sflag [#allocation4], 1
    %595 = vsyncpa %s594, 1

</llo_original>
